<compile_context>
chip_gen: v7x
topology: tpu7x:2x2x1
jax: 0.10.0
libtpu: 0.0.40
codegen_flags: <defaults>
</compile_context>

<pallas_src>
import functools

import jax
import jax.numpy as jnp
from jax.experimental import pallas as pl
from jax.experimental.pallas import tpu as pltpu


# ---------------------------------------------------------------------------
# helpers
# ---------------------------------------------------------------------------
def _round_up(x, m):
    return ((x + m - 1) // m) * m


def _pad_to(x, axis, target, value=0):
    size = x.shape[axis]
    if size == target:
        return x
    widths = [(0, 0)] * x.ndim
    widths[axis] = (0, target - size)
    return jnp.pad(x, widths, constant_values=value)


# ---------------------------------------------------------------------------
# Kernel A: attention MLP  alpha = sigmoid(w2 . act(x @ W1 + b1) + b2)
#   erps is NOT concatenated; W1 is split into 4 row blocks (4 dots).
# ---------------------------------------------------------------------------
def _attention_kernel(src_ref, dst_ref, er_ref, et_ref,
                      w1s_ref, w1d_ref, w1e_ref, w1t_ref,
                      b1_ref, w2_ref, b2_ref, alphas_ref, *, activate):
    h = jnp.dot(src_ref[...], w1s_ref[...], preferred_element_type=jnp.float32)
    h = h + jnp.dot(dst_ref[...], w1d_ref[...],
                    preferred_element_type=jnp.float32)
    h = h + jnp.dot(er_ref[...], w1e_ref[...],
                    preferred_element_type=jnp.float32)
    h = h + jnp.dot(et_ref[...], w1t_ref[...],
                    preferred_element_type=jnp.float32)
    h = h + b1_ref[...]
    h = jnp.maximum(h, 0.0) if activate == "relu" else jnp.tanh(h)
    # second Linear has a single output unit -> lane reduction (XLU), f32
    a = jnp.sum(h * w2_ref[...], axis=-1, keepdims=True) + b2_ref[...]
    # (TE,1) output is a masked store, but it is tiny vs. the inputs.
    alphas_ref[...] = jax.nn.sigmoid(a)


# ---------------------------------------------------------------------------
# Kernel B: per-edge relational messages, computed ONCE per edge tile.
#   msg[e] = sum_b (comp*alpha)[e,b] * (src[e] @ W_b)   via one wide MXU matmul
# ---------------------------------------------------------------------------
def _edge_message_kernel(src_ref, comp_ref, wflat_ref, msg_ref, *,
                         num_bases, dout_pad):
    msg_all = jnp.dot(src_ref[...], wflat_ref[...],
                      preferred_element_type=jnp.float32)   # (TE, B*Dp) f32
    comp = comp_ref[...]                                    # (TE, B) f32 (alpha-folded)
    msg = comp[:, 0:1] * msg_all[:, :dout_pad]
    for b in range(1, num_bases):                           # small static loop
        msg = msg + comp[:, b:b + 1] * msg_all[:, b * dout_pad:(b + 1) * dout_pad]
    msg_ref[...] = msg.astype(msg_ref.dtype)                # bf16 store if use_bf16


# ---------------------------------------------------------------------------
# Kernel C: on-the-fly one-hot scatter-add + degree-scaled self update +
#           activation.  Grid = (node tiles, edge tiles), edge axis is the
#           reduction ("arbitrary") axis.
# ---------------------------------------------------------------------------
def _scatter_update_kernel(msg_ref, dstid_ref, vfts_ref, update_ref,
                           vrps_ref, acc_ref, deg_ref, *, activate):
    k = pl.program_id(1)

    @pl.when(k == 0)
    def _init():
        acc_ref[...] = jnp.zeros_like(acc_ref)
        deg_ref[...] = jnp.zeros_like(deg_ref)

    # one-hot scatter block for this (node-tile, edge-tile) pair, built from a
    # (TN,1) row-id column broadcast against the (1,TE) dst-id row.
    tile_n = acc_ref.shape[0]
    node_base = pl.program_id(0) * tile_n
    row_col = node_base + jax.lax.broadcasted_iota(jnp.int32, (tile_n, 1), 0)
    hit = row_col == dstid_ref[...]                          # (TN, TE) bool
    onehot = hit.astype(msg_ref.dtype)                       # matmul dtype (bf16/f32)

    # scatter-add (index_add_ over adjs[1]) on the MXU, f32 accumulation
    acc_ref[...] += jnp.dot(onehot, msg_ref[...],
                            preferred_element_type=jnp.float32)
    # per-node degree for the self-update term (exact small ints in f32)
    deg_ref[...] += jnp.sum(hit.astype(jnp.float32), axis=1, keepdims=True)

    @pl.when(k == pl.num_programs(1) - 1)
    def _finalize():
        dsts = jnp.dot(vfts_ref[...], update_ref[...],
                       preferred_element_type=jnp.float32)   # (TN, Dp)
        out = acc_ref[...] + deg_ref[...] * dsts              # deg(n) * dsts[n]
        out = jnp.maximum(out, 0.0) if activate == "relu" else jnp.tanh(out)
        vrps_ref[...] = out.astype(vrps_ref.dtype)            # lane-dense store


# ---------------------------------------------------------------------------
# Wrapper (gathers + padding + pallas_call plumbing)
# ---------------------------------------------------------------------------
def grail_conv_forward(params, vfts, adjs, rels, embed_rels, embed_rels_target,
                       *, activate="relu", tile_n=256, tile_e=1024,
                       use_bf16=True, vmem_limit_bytes=48 * 1024 * 1024):
    f32 = jnp.float32
    mm_dtype = jnp.bfloat16 if use_bf16 else jnp.float32
    isz = 2 if use_bf16 else 4

    n_nodes, din = vfts.shape
    n_edges = adjs.shape[1]
    d_edge = embed_rels.shape[1]
    num_bases, _, num_outputs = params["weight"].shape
    dh = params["attn_w1"].shape[1]          # attention hidden == num_outputs

    # --- tile sizes (lane/sublane aligned, bf16-pack aligned), padded extents ---
    tile_e = max(128, (tile_e // 128) * 128)
    tile_e = min(tile_e, _round_up(n_edges, 128))
    e_pad = _round_up(n_edges, tile_e)
    tile_n = max(16, (tile_n // 16) * 16)
    tile_n = min(tile_n, _round_up(n_nodes, 16))
    n_pad = _round_up(n_nodes, tile_n)
    dout_pad = _round_up(num_outputs, 128)   # lane-dense output stores

    # --- gathers (XLA glue, data-dependent) ---
    src_feat = vfts[adjs[0]]                 # (E, Din)
    dst_feat = vfts[adjs[1]]                 # (E, Din)  (attention input only)

    # --- streamed operands: pad + cast to matmul dtype in the wrapper ---
    src_p = _pad_to(src_feat, 0, e_pad).astype(mm_dtype)
    dst_p = _pad_to(dst_feat, 0, e_pad).astype(mm_dtype)
    er_p = _pad_to(embed_rels, 0, e_pad).astype(mm_dtype)
    et_p = _pad_to(embed_rels_target, 0, e_pad).astype(mm_dtype)
    w1 = params["attn_w1"]
    w1s = w1[:din].astype(mm_dtype)
    w1d = w1[din:2 * din].astype(mm_dtype)
    w1e = w1[2 * din:2 * din + d_edge].astype(mm_dtype)
    w1t = w1[2 * din + d_edge:].astype(mm_dtype)
    b1 = params["attn_b1"].astype(f32)
    w2 = params["attn_w2"].astype(f32)
    b2 = params["attn_b2"].astype(f32)

    # --- Kernel A: per-edge attention, tiled over the edge axis ---
    f_in = 2 * din + 2 * d_edge
    cost_a = pl.CostEstimate(
        flops=2 * e_pad * f_in * dh + 4 * e_pad * dh,
        transcendentals=e_pad * (dh + 1) if activate == "tanh" else e_pad,
        bytes_accessed=(isz * e_pad * f_in + isz * f_in * dh
                        + 4 * (2 * dh + 1) + 4 * e_pad))

    def _edge_spec(d):
        return pl.BlockSpec((tile_e, d), lambda e: (e, 0))

    def _full_spec(shape):
        return pl.BlockSpec(shape, lambda e: (0,) * len(shape))

    alphas_p = pl.pallas_call(
        functools.partial(_attention_kernel, activate=activate),
        grid_spec=pltpu.PrefetchScalarGridSpec(
            num_scalar_prefetch=0,
            grid=(e_pad // tile_e,),
            in_specs=[_edge_spec(din), _edge_spec(din),
                      _edge_spec(d_edge), _edge_spec(d_edge),
                      _full_spec((din, dh)), _full_spec((din, dh)),
                      _full_spec((d_edge, dh)), _full_spec((d_edge, dh)),
                      _full_spec((1, dh)), _full_spec((1, dh)),
                      _full_spec((1, 1))],
            out_specs=pl.BlockSpec((tile_e, 1), lambda e: (e, 0)),
        ),
        out_shape=jax.ShapeDtypeStruct((e_pad, 1), f32),
        compiler_params=pltpu.CompilerParams(
            dimension_semantics=("parallel",),
            vmem_limit_bytes=vmem_limit_bytes),
        cost_estimate=cost_a,
    )(src_p, dst_p, er_p, et_p, w1s, w1d, w1e, w1t, b1, w2, b2)
    alphas = alphas_p[:n_edges]              # (E, 1)

    # --- glue: fold attention into the basis coefficients (torch quirk kept:
    #     alphas and comp are both indexed by the relation id) ---
    comp_alpha = params["comp"].astype(f32)[rels] * alphas[rels]     # (E, B) f32
    comp_alpha_p = _pad_to(comp_alpha, 0, e_pad)

    # --- Kernel B: per-edge messages, computed once per edge tile ---
    w_pad = _pad_to(params["weight"], 2, dout_pad)                    # (B, Din, Dp)
    w_flat = jnp.transpose(w_pad, (1, 0, 2)).reshape(
        din, num_bases * dout_pad).astype(mm_dtype)                   # (Din, B*Dp)

    cost_b = pl.CostEstimate(
        flops=2 * e_pad * din * num_bases * dout_pad
              + 2 * e_pad * num_bases * dout_pad,
        transcendentals=0,
        bytes_accessed=(isz * e_pad * din + 4 * e_pad * num_bases
                        + isz * din * num_bases * dout_pad
                        + isz * e_pad * dout_pad))

    msg_p = pl.pallas_call(
        functools.partial(_edge_message_kernel,
                          num_bases=num_bases, dout_pad=dout_pad),
        grid_spec=pltpu.PrefetchScalarGridSpec(
            num_scalar_prefetch=0,
            grid=(e_pad // tile_e,),
            in_specs=[
                pl.BlockSpec((tile_e, din), lambda e: (e, 0)),          # src
                pl.BlockSpec((tile_e, num_bases), lambda e: (e, 0)),    # comp*alpha
                pl.BlockSpec((din, num_bases * dout_pad),
                             lambda e: (0, 0)),                         # W_flat
            ],
            out_specs=pl.BlockSpec((tile_e, dout_pad), lambda e: (e, 0)),
        ),
        out_shape=jax.ShapeDtypeStruct((e_pad, dout_pad), mm_dtype),
        compiler_params=pltpu.CompilerParams(
            dimension_semantics=("parallel",),
            vmem_limit_bytes=vmem_limit_bytes),
        cost_estimate=cost_b,
    )(src_p, comp_alpha_p, w_flat)

    # --- Kernel C: scatter-add + degree-scaled self update + activation ---
    dst_ids = adjs[1].astype(jnp.int32)[None, :]                      # (1, E)
    dst_ids_p = _pad_to(dst_ids, 1, e_pad, value=-1)   # padded edges never hit
    vfts_p = _pad_to(vfts, 0, n_pad).astype(mm_dtype)
    update_p = _pad_to(params["update"], 1, dout_pad).astype(mm_dtype)  # (Din, Dp)

    n_tiles = n_pad // tile_n
    cost_c = pl.CostEstimate(
        flops=2 * n_pad * e_pad * dout_pad + 2 * n_pad * din * dout_pad,
        transcendentals=n_pad * dout_pad if activate == "tanh" else 0,
        bytes_accessed=(n_tiles * (isz * e_pad * dout_pad + 4 * e_pad)
                        + isz * (n_pad * din + din * dout_pad)
                        + 4 * n_pad * dout_pad))

    vrps_p = pl.pallas_call(
        functools.partial(_scatter_update_kernel, activate=activate),
        grid_spec=pltpu.PrefetchScalarGridSpec(
            num_scalar_prefetch=0,
            grid=(n_tiles, e_pad // tile_e),
            in_specs=[
                pl.BlockSpec((tile_e, dout_pad), lambda i, k: (k, 0)),   # msg
                pl.BlockSpec((1, tile_e), lambda i, k: (0, k)),          # dst ids
                pl.BlockSpec((tile_n, din), lambda i, k: (i, 0)),        # vfts
                pl.BlockSpec((din, dout_pad), lambda i, k: (0, 0)),      # update
            ],
            out_specs=pl.BlockSpec((tile_n, dout_pad), lambda i, k: (i, 0)),
            scratch_shapes=[pltpu.VMEM((tile_n, dout_pad), jnp.float32),
                            pltpu.VMEM((tile_n, 1), jnp.float32)],
        ),
        out_shape=jax.ShapeDtypeStruct((n_pad, dout_pad), f32),
        compiler_params=pltpu.CompilerParams(
            dimension_semantics=("parallel", "arbitrary"),
            vmem_limit_bytes=vmem_limit_bytes),
        cost_estimate=cost_c,
    )(msg_p, dst_ids_p, vfts_p, update_p)

    return vrps_p[:n_nodes, :num_outputs]


# ---------------------------------------------------------------------------
# Pure-JAX reference, mirrors the PyTorch forward statement-by-statement
# ---------------------------------------------------------------------------
def grail_conv_reference(params, vfts, adjs, rels, embed_rels,
                         embed_rels_target, *, activate="relu"):
    act = (lambda x: jnp.maximum(x, 0.0)) if activate == "relu" else jnp.tanh
    num_bases, din, dout = params["weight"].shape
    num_relations = params["comp"].shape[0]

    erps = jnp.concatenate(
        (vfts[adjs[0]], vfts[adjs[1]], embed_rels, embed_rels_target), axis=1)
    h = act(erps @ params["attn_w1"] + params["attn_b1"][0])
    alphas = jax.nn.sigmoid(h @ params["attn_w2"][0][:, None]
                            + params["attn_b2"][0])
    weight = (params["comp"] @ params["weight"].reshape(num_bases, din * dout)
              ).reshape(num_relations, din, dout)
    srcs = jnp.matmul(vfts.reshape(1, len(vfts), din), weight)   # (R, N, Dout)
    srcs = alphas[rels] * srcs[rels, adjs[0]]                    # (E, Dout)
    vrps = jnp.zeros((len(vfts), dout), vfts.dtype)
    vrps = vrps.at[adjs[1]].add(srcs)
    dsts = vfts @ params["update"]
    vrps = vrps.at[adjs[1]].add(dsts[adjs[1]])
    return act(vrps)


# ---------------------------------------------------------------------------
def _glorot(key, shape, fanin, fanout):
    limit = jnp.sqrt(6.0 / (fanin + fanout))
    return jax.random.uniform(key, shape, jnp.float32, -limit, limit)


if __name__ == "__main__":
    # Small, deterministic synthetic problem.
    N, E = 16, 32                 # nodes, edges
    DIN_NODE, DIN_EDGE = 32, 16   # node / edge input dims
    DOUT = 32                     # output dim
    R, B = 4, 2                   # relations, bases
    ACT = "relu"
    F_IN = 2 * DIN_NODE + 2 * DIN_EDGE

    key = jax.random.PRNGKey(0)
    ks = jax.random.split(key, 10)

    params = {
        "weight": _glorot(ks[0], (B, DIN_NODE, DOUT), DIN_NODE, DOUT),
        "comp": _glorot(ks[1], (R, B), B, R),
        "attn_w1": _glorot(ks[2], (F_IN, DOUT), F_IN, DOUT),
        "attn_b1": jnp.zeros((1, DOUT), jnp.float32),
        "attn_w2": _glorot(ks[3], (1, DOUT), DOUT, 1),   # stored as (1, Dout)
        "attn_b2": jnp.zeros((1, 1), jnp.float32),
        "update": _glorot(ks[4], (DIN_NODE, DOUT), DIN_NODE, DOUT),
    }

    vfts = jax.random.normal(ks[5], (N, DIN_NODE), jnp.float32)
    adjs = jax.random.randint(ks[6], (2, E), 0, N, jnp.int32)
    rels = jax.random.randint(ks[7], (E,), 0, R, jnp.int32)
    embed_rels = jax.random.normal(ks[8], (E, DIN_EDGE), jnp.float32)
    embed_rels_target = jax.random.normal(ks[9], (E, DIN_EDGE), jnp.float32)

    ref = grail_conv_reference(params, vfts, adjs, rels, embed_rels,
                               embed_rels_target, activate=ACT)

    # f32 matmuls: tight tolerance against the f32 reference
    out = grail_conv_forward(params, vfts, adjs, rels, embed_rels,
                             embed_rels_target, activate=ACT, use_bf16=False)
    out = jax.block_until_ready(out)
    assert out.shape == (N, DOUT) and out.dtype == jnp.float32
    assert jnp.allclose(out, ref, rtol=1e-4, atol=1e-4), (
        float(jnp.max(jnp.abs(out - ref))))

    # bf16 matmul operands everywhere (f32 accumulation): loose tolerance
    out_bf = grail_conv_forward(params, vfts, adjs, rels, embed_rels,
                                embed_rels_target, activate=ACT, use_bf16=True)
    out_bf = jax.block_until_ready(out_bf)
    assert out_bf.shape == (N, DOUT) and out_bf.dtype == jnp.float32
    assert jnp.allclose(out_bf, ref, rtol=5e-2, atol=5e-2), (
        float(jnp.max(jnp.abs(out_bf - ref))))

    print("KERNEL_OK")
</pallas_src>

<mosaic_0001>
module attributes {stable_mosaic.version = 11 : i64} {
  func.func @_attention_kernel(%arg0: i32, %arg1: memref<128x32xf32, #tpu.memory_space<vmem>>, %arg2: memref<128x32xf32, #tpu.memory_space<vmem>>, %arg3: memref<128x16xf32, #tpu.memory_space<vmem>>, %arg4: memref<128x16xf32, #tpu.memory_space<vmem>>, %arg5: memref<32x32xf32, #tpu.memory_space<vmem>>, %arg6: memref<32x32xf32, #tpu.memory_space<vmem>>, %arg7: memref<16x32xf32, #tpu.memory_space<vmem>>, %arg8: memref<16x32xf32, #tpu.memory_space<vmem>>, %arg9: memref<1x32xf32, #tpu.memory_space<vmem>>, %arg10: memref<1x32xf32, #tpu.memory_space<vmem>>, %arg11: memref<1x1xf32, #tpu.memory_space<vmem>>, %arg12: memref<128x1xf32, #tpu.memory_space<vmem>>) attributes {dimension_semantics = [#tpu.dimension_semantics<parallel>], iteration_bounds = array<i64: 1>, scalar_prefetch = 0 : i64, scratch_operands = 0 : i64, tpu.core_type = #tpu.core_type<tc>, window_params = [{transform_indices = @transform_0, window_bounds = array<i64: 128, 32>}, {transform_indices = @transform_1, window_bounds = array<i64: 128, 32>}, {transform_indices = @transform_2, window_bounds = array<i64: 128, 16>}, {transform_indices = @transform_3, window_bounds = array<i64: 128, 16>}, {pipeline_mode = #tpu.pipeline_mode<synchronous>, transform_indices = @transform_4, window_bounds = array<i64: 32, 32>}, {pipeline_mode = #tpu.pipeline_mode<synchronous>, transform_indices = @transform_5, window_bounds = array<i64: 32, 32>}, {pipeline_mode = #tpu.pipeline_mode<synchronous>, transform_indices = @transform_6, window_bounds = array<i64: 16, 32>}, {pipeline_mode = #tpu.pipeline_mode<synchronous>, transform_indices = @transform_7, window_bounds = array<i64: 16, 32>}, {pipeline_mode = #tpu.pipeline_mode<synchronous>, transform_indices = @transform_8, window_bounds = array<i64: 1, 32>}, {pipeline_mode = #tpu.pipeline_mode<synchronous>, transform_indices = @transform_9, window_bounds = array<i64: 1, 32>}, {pipeline_mode = #tpu.pipeline_mode<synchronous>, transform_indices = @transform_10, window_bounds = array<i64: 1, 1>}, {transform_indices = @transform_11, window_bounds = array<i64: 128, 1>}]} {
    %c0 = arith.constant 0 : index
    %c0_0 = arith.constant 0 : index
    %0 = vector.load %arg1[%c0, %c0_0] : memref<128x32xf32, #tpu.memory_space<vmem>>, vector<128x32xf32>
    %c0_1 = arith.constant 0 : index
    %c0_2 = arith.constant 0 : index
    %1 = vector.load %arg5[%c0_1, %c0_2] : memref<32x32xf32, #tpu.memory_space<vmem>>, vector<32x32xf32>
    %cst = arith.constant dense<0.000000e+00> : vector<128x32xf32>
    %2 = tpu.matmul %0, %1, %cst {dimension_numbers = #tpu.dot_dimension_numbers<[1], [0], [0], [1], [0, 0, 1, 1], [], []>} : vector<128x32xf32>, vector<32x32xf32>, vector<128x32xf32> -> vector<128x32xf32>
    %c0_3 = arith.constant 0 : index
    %c0_4 = arith.constant 0 : index
    %3 = vector.load %arg2[%c0_3, %c0_4] : memref<128x32xf32, #tpu.memory_space<vmem>>, vector<128x32xf32>
    %c0_5 = arith.constant 0 : index
    %c0_6 = arith.constant 0 : index
    %4 = vector.load %arg6[%c0_5, %c0_6] : memref<32x32xf32, #tpu.memory_space<vmem>>, vector<32x32xf32>
    %cst_7 = arith.constant dense<0.000000e+00> : vector<128x32xf32>
    %5 = tpu.matmul %3, %4, %cst_7 {dimension_numbers = #tpu.dot_dimension_numbers<[1], [0], [0], [1], [0, 0, 1, 1], [], []>} : vector<128x32xf32>, vector<32x32xf32>, vector<128x32xf32> -> vector<128x32xf32>
    %6 = arith.addf %2, %5 : vector<128x32xf32>
    %c0_8 = arith.constant 0 : index
    %c0_9 = arith.constant 0 : index
    %7 = vector.load %arg3[%c0_8, %c0_9] : memref<128x16xf32, #tpu.memory_space<vmem>>, vector<128x16xf32>
    %c0_10 = arith.constant 0 : index
    %c0_11 = arith.constant 0 : index
    %8 = vector.load %arg7[%c0_10, %c0_11] : memref<16x32xf32, #tpu.memory_space<vmem>>, vector<16x32xf32>
    %cst_12 = arith.constant dense<0.000000e+00> : vector<128x32xf32>
    %9 = tpu.matmul %7, %8, %cst_12 {dimension_numbers = #tpu.dot_dimension_numbers<[1], [0], [0], [1], [0, 0, 1, 1], [], []>} : vector<128x16xf32>, vector<16x32xf32>, vector<128x32xf32> -> vector<128x32xf32>
    %10 = arith.addf %6, %9 : vector<128x32xf32>
    %c0_13 = arith.constant 0 : index
    %c0_14 = arith.constant 0 : index
    %11 = vector.load %arg4[%c0_13, %c0_14] : memref<128x16xf32, #tpu.memory_space<vmem>>, vector<128x16xf32>
    %c0_15 = arith.constant 0 : index
    %c0_16 = arith.constant 0 : index
    %12 = vector.load %arg8[%c0_15, %c0_16] : memref<16x32xf32, #tpu.memory_space<vmem>>, vector<16x32xf32>
    %cst_17 = arith.constant dense<0.000000e+00> : vector<128x32xf32>
    %13 = tpu.matmul %11, %12, %cst_17 {dimension_numbers = #tpu.dot_dimension_numbers<[1], [0], [0], [1], [0, 0, 1, 1], [], []>} : vector<128x16xf32>, vector<16x32xf32>, vector<128x32xf32> -> vector<128x32xf32>
    %14 = arith.addf %10, %13 : vector<128x32xf32>
    %c0_18 = arith.constant 0 : index
    %c0_19 = arith.constant 0 : index
    %15 = vector.load %arg9[%c0_18, %c0_19] : memref<1x32xf32, #tpu.memory_space<vmem>>, vector<1x32xf32>
    %16 = vector.broadcast %15 : vector<1x32xf32> to vector<128x32xf32>
    %17 = arith.addf %14, %16 : vector<128x32xf32>
    %cst_20 = arith.constant 0.000000e+00 : f32
    %18 = vector.broadcast %cst_20 : f32 to vector<128x32xf32>
    %19 = arith.maximumf %17, %18 : vector<128x32xf32>
    %c0_21 = arith.constant 0 : index
    %c0_22 = arith.constant 0 : index
    %20 = vector.load %arg10[%c0_21, %c0_22] : memref<1x32xf32, #tpu.memory_space<vmem>>, vector<1x32xf32>
    %21 = vector.broadcast %20 : vector<1x32xf32> to vector<128x32xf32>
    %22 = arith.mulf %19, %21 : vector<128x32xf32>
    %cst_23 = arith.constant dense<0.000000e+00> : vector<128xf32>
    %23 = vector.multi_reduction <add>, %22, %cst_23 [1] : vector<128x32xf32> to vector<128xf32>
    %24 = vector.shape_cast %23 : vector<128xf32> to vector<128x1xf32>
    %c0_24 = arith.constant 0 : index
    %c0_25 = arith.constant 0 : index
    %25 = vector.load %arg11[%c0_24, %c0_25] : memref<1x1xf32, #tpu.memory_space<vmem>>, vector<1x1xf32>
    %26 = vector.broadcast %25 : vector<1x1xf32> to vector<128x1xf32>
    %27 = arith.addf %24, %26 : vector<128x1xf32>
    %28 = arith.negf %27 : vector<128x1xf32>
    %29 = math.exp %28 : vector<128x1xf32>
    %cst_26 = arith.constant 1.000000e+00 : f32
    %30 = vector.broadcast %cst_26 : f32 to vector<128x1xf32>
    %31 = arith.addf %30, %29 : vector<128x1xf32>
    %32 = arith.divf %30, %31 : vector<128x1xf32>
    %c0_27 = arith.constant 0 : index
    %c0_28 = arith.constant 0 : index
    %33 = vector.load %arg12[%c0_27, %c0_28] : memref<128x1xf32, #tpu.memory_space<vmem>>, vector<128x1xf32>
    tpu.vector_store %arg12[%c0_27, %c0_28], %32 {strides = array<i32>} : memref<128x1xf32, #tpu.memory_space<vmem>>, vector<128x1xf32>,
    return
  }
  func.func @transform_0(%arg0: i32) -> (i32, i32) {
    %c0_i32 = arith.constant 0 : i32
    %c0_i32_0 = arith.constant 0 : i32
    return %arg0, %c0_i32 : i32, i32
  }
  func.func @transform_1(%arg0: i32) -> (i32, i32) {
    %c0_i32 = arith.constant 0 : i32
    %c0_i32_0 = arith.constant 0 : i32
    return %arg0, %c0_i32 : i32, i32
  }
  func.func @transform_2(%arg0: i32) -> (i32, i32) {
    %c0_i32 = arith.constant 0 : i32
    %c0_i32_0 = arith.constant 0 : i32
    return %arg0, %c0_i32 : i32, i32
  }
  func.func @transform_3(%arg0: i32) -> (i32, i32) {
    %c0_i32 = arith.constant 0 : i32
    %c0_i32_0 = arith.constant 0 : i32
    return %arg0, %c0_i32 : i32, i32
  }
  func.func @transform_4(%arg0: i32) -> (i32, i32) {
    %c0_i32 = arith.constant 0 : i32
    %c0_i32_0 = arith.constant 0 : i32
    %c0_i32_1 = arith.constant 0 : i32
    return %c0_i32, %c0_i32_0 : i32, i32
  }
  func.func @transform_5(%arg0: i32) -> (i32, i32) {
    %c0_i32 = arith.constant 0 : i32
    %c0_i32_0 = arith.constant 0 : i32
    %c0_i32_1 = arith.constant 0 : i32
    return %c0_i32, %c0_i32_0 : i32, i32
  }
  func.func @transform_6(%arg0: i32) -> (i32, i32) {
    %c0_i32 = arith.constant 0 : i32
    %c0_i32_0 = arith.constant 0 : i32
    %c0_i32_1 = arith.constant 0 : i32
    return %c0_i32, %c0_i32_0 : i32, i32
  }
  func.func @transform_7(%arg0: i32) -> (i32, i32) {
    %c0_i32 = arith.constant 0 : i32
    %c0_i32_0 = arith.constant 0 : i32
    %c0_i32_1 = arith.constant 0 : i32
    return %c0_i32, %c0_i32_0 : i32, i32
  }
  func.func @transform_8(%arg0: i32) -> (i32, i32) {
    %c0_i32 = arith.constant 0 : i32
    %c0_i32_0 = arith.constant 0 : i32
    %c0_i32_1 = arith.constant 0 : i32
    return %c0_i32, %c0_i32_0 : i32, i32
  }
  func.func @transform_9(%arg0: i32) -> (i32, i32) {
    %c0_i32 = arith.constant 0 : i32
    %c0_i32_0 = arith.constant 0 : i32
    %c0_i32_1 = arith.constant 0 : i32
    return %c0_i32, %c0_i32_0 : i32, i32
  }
  func.func @transform_10(%arg0: i32) -> (i32, i32) {
    %c0_i32 = arith.constant 0 : i32
    %c0_i32_0 = arith.constant 0 : i32
    %c0_i32_1 = arith.constant 0 : i32
    return %c0_i32, %c0_i32_0 : i32, i32
  }
  func.func @transform_11(%arg0: i32) -> (i32, i32) {
    %c0_i32 = arith.constant 0 : i32
    %c0_i32_0 = arith.constant 0 : i32
    return %arg0, %c0_i32 : i32, i32
  }
}

</mosaic_0001>

<llo_original>
// kernel: tpu_custom_call.1
$region0: #{tpu_custom_call.1}
  #allocation0 [shape = 'u32[]', space=smem, size = 0x4, offset = 0x4, fixed_abs, tag = 'smem constant byte address 0x4 - core index']
  #allocation1 [shape = 'u32[144,128]{1,0:T(1,128)}', space=vmem, size = 0x12000, scoped, tag = 'internal scratch']
  #allocation2 [shape = 'f32[1,1]{1,0:T(1,128)S(1)}', space=vmem, size = 0x200, scoped, tag = 'scoped memory for tpu_custom_call.1']
  %s0 = inlined_call_operand.vmem [shape: f32[128,32], index: 0, kind: input, shape index: {}]
  %s1 = inlined_call_operand.vmem [shape: f32[128,32], index: 1, kind: input, shape index: {}]
  %s2 = inlined_call_operand.vmem [shape: f32[128,16], index: 2, kind: input, shape index: {}]
  %s3 = inlined_call_operand.vmem [shape: f32[128,16], index: 3, kind: input, shape index: {}]
  %s4 = inlined_call_operand.vmem [shape: f32[32,32], index: 4, kind: input, shape index: {}]
  %s5 = inlined_call_operand.vmem [shape: f32[32,32], index: 5, kind: input, shape index: {}]
  %s6 = inlined_call_operand.vmem [shape: f32[16,32], index: 6, kind: input, shape index: {}]
  %s7 = inlined_call_operand.vmem [shape: f32[16,32], index: 7, kind: input, shape index: {}]
  %s8 = inlined_call_operand.vmem [shape: f32[1,32], index: 8, kind: input, shape index: {}]
  %s9 = inlined_call_operand.vmem [shape: f32[1,32], index: 9, kind: input, shape index: {}]
  %s10 = inlined_call_operand.<no memory space> [shape: f32[1,1], index: 10, kind: input, shape index: {}]
  %s11 = inlined_call_operand.vmem [shape: f32[128,1], index: 11, kind: output, shape index: {}]
  %s12 = sld [smem:[#allocation0]]
  $region54: #{tpu_custom_call.1} parent=0
    _
  %s14 = ssub.s32 1, %s12
  %s15 = scalar_select 0, %s14, %s12
  %v16 = vstv %s10
  %17 = vst [vmem:[#allocation2] sm:$0x1] %v16
  // Predicated region
  $region2: #{tpu_custom_call.1} parent=0 // pred_check
    _
  $region3: #{tpu_custom_call.1} parent=0 // pred_check_branch
    %19 = sbr.rel (0) target = $region5
  $region4: #{tpu_custom_call.1} parent=0 // pred_region
    _
  $region5: #{tpu_custom_call.1} parent=0 // pred_fallthru
    _
  // Predicated region
  $region6: #{tpu_custom_call.1} parent=0 // pred_check
    _
  $region7: #{tpu_custom_call.1} parent=0 // pred_check_branch
    %21 = sbr.rel (0) target = $region9
  $region8: #{tpu_custom_call.1} parent=0 // pred_region
    _
  $region9: #{tpu_custom_call.1} parent=0 // pred_fallthru
    _
  // Predicated region
  $region10: #{tpu_custom_call.1} parent=0 // pred_check
    _
  $region11: #{tpu_custom_call.1} parent=0 // pred_check_branch
    %23 = sbr.rel (0) target = $region13
  $region12: #{tpu_custom_call.1} parent=0 // pred_region
    _
  $region13: #{tpu_custom_call.1} parent=0 // pred_fallthru
    _
  // Predicated region
  $region14: #{tpu_custom_call.1} parent=0 // pred_check
    _
  $region15: #{tpu_custom_call.1} parent=0 // pred_check_branch
    %25 = sbr.rel (0) target = $region17
  $region16: #{tpu_custom_call.1} parent=0 // pred_region
    _
  $region17: #{tpu_custom_call.1} parent=0 // pred_fallthru
    _
  // Predicated region
  $region18: #{tpu_custom_call.1} parent=0 // pred_check
    _
  $region19: #{tpu_custom_call.1} parent=0 // pred_check_branch
    %27 = sbr.rel (0) target = $region21
  $region20: #{tpu_custom_call.1} parent=0 // pred_region
    _
  $region21: #{tpu_custom_call.1} parent=0 // pred_fallthru
    _
  // Predicated region
  $region22: #{tpu_custom_call.1} parent=0 // pred_check
    _
  $region23: #{tpu_custom_call.1} parent=0 // pred_check_branch
    %29 = sbr.rel (0) target = $region25
  $region24: #{tpu_custom_call.1} parent=0 // pred_region
    _
  $region25: #{tpu_custom_call.1} parent=0 // pred_fallthru
    _
  // Predicated region
  $region26: #{tpu_custom_call.1} parent=0 // pred_check
    _
  $region27: #{tpu_custom_call.1} parent=0 // pred_check_branch
    %31 = sbr.rel (0) target = $region29
  $region28: #{tpu_custom_call.1} parent=0 // pred_region
    _
  $region29: #{tpu_custom_call.1} parent=0 // pred_fallthru
    _
  // Predicated region
  $region30: #{tpu_custom_call.1} parent=0 // pred_check
    _
  $region31: #{tpu_custom_call.1} parent=0 // pred_check_branch
    %33 = sbr.rel (0) target = $region33
  $region32: #{tpu_custom_call.1} parent=0 // pred_region
    _
  $region33: #{tpu_custom_call.1} parent=0 // pred_fallthru
    _
  // Predicated region
  $region34: #{tpu_custom_call.1} parent=0 // pred_check
    _
  $region35: #{tpu_custom_call.1} parent=0 // pred_check_branch
    %35 = sbr.rel (0) target = $region37
  $region36: #{tpu_custom_call.1} parent=0 // pred_region
    _
  $region37: #{tpu_custom_call.1} parent=0 // pred_fallthru
    _
  // Predicated region
  $region38: #{tpu_custom_call.1} parent=0 // pred_check
    _
  $region39: #{tpu_custom_call.1} parent=0 // pred_check_branch
    %37 = sbr.rel (0) target = $region41
  $region40: #{tpu_custom_call.1} parent=0 // pred_region
    _
  $region41: #{tpu_custom_call.1} parent=0 // pred_fallthru
    _
  // Predicated region
  $region42: #{tpu_custom_call.1} parent=0 // pred_check
    _
  $region43: #{tpu_custom_call.1} parent=0 // pred_check_branch
    %39 = sbr.rel (0) target = $region45
  $region44: #{tpu_custom_call.1} parent=0 // pred_region
    _
  $region45: #{tpu_custom_call.1} parent=0 // pred_fallthru
    _
  %v40 = vld [vmem:[%s0] sm:$0xff]
  %v41 = vld [vmem:[%s0 + $0x8] sm:$0xff]
  %v42 = vld [vmem:[%s0 + $0x10] sm:$0xff]
  %v43 = vld [vmem:[%s0 + $0x18] sm:$0xff]
  %v44 = vld [vmem:[%s0 + $0x20] sm:$0xff]
  %v45 = vld [vmem:[%s0 + $0x28] sm:$0xff]
  %v46 = vld [vmem:[%s0 + $0x30] sm:$0xff]
  %v47 = vld [vmem:[%s0 + $0x38] sm:$0xff]
  %v48 = vld [vmem:[%s0 + $0x40] sm:$0xff]
  %v49 = vld [vmem:[%s0 + $0x48] sm:$0xff]
  %v50 = vld [vmem:[%s0 + $0x50] sm:$0xff]
  %v51 = vld [vmem:[%s0 + $0x58] sm:$0xff]
  %v52 = vld [vmem:[%s0 + $0x60] sm:$0xff]
  %v53 = vld [vmem:[%s0 + $0x68] sm:$0xff]
  %v54 = vld [vmem:[%s0 + $0x70] sm:$0xff]
  %v55 = vld [vmem:[%s0 + $0x78] sm:$0xff]
  %v56 = vld [vmem:[%s4] sm:$0xff]
  %v57 = vld [vmem:[%s4 + $0x8] sm:$0xff]
  %v58 = vld [vmem:[%s4 + $0x10] sm:$0xff]
  %v59 = vld [vmem:[%s4 + $0x18] sm:$0xff]
  %v60 = vld [vmem:[%s1] sm:$0xff]
  %v61 = vld [vmem:[%s1 + $0x8] sm:$0xff]
  %v62 = vld [vmem:[%s1 + $0x10] sm:$0xff]
  %v63 = vld [vmem:[%s1 + $0x18] sm:$0xff]
  %v64 = vld [vmem:[%s1 + $0x20] sm:$0xff]
  %v65 = vld [vmem:[%s1 + $0x28] sm:$0xff]
  %v66 = vld [vmem:[%s1 + $0x30] sm:$0xff]
  %v67 = vld [vmem:[%s1 + $0x38] sm:$0xff]
  %v68 = vld [vmem:[%s1 + $0x40] sm:$0xff]
  %v69 = vld [vmem:[%s1 + $0x48] sm:$0xff]
  %v70 = vld [vmem:[%s1 + $0x50] sm:$0xff]
  %v71 = vld [vmem:[%s1 + $0x58] sm:$0xff]
  %v72 = vld [vmem:[%s1 + $0x60] sm:$0xff]
  %v73 = vld [vmem:[%s1 + $0x68] sm:$0xff]
  %v74 = vld [vmem:[%s1 + $0x70] sm:$0xff]
  %v75 = vld [vmem:[%s1 + $0x78] sm:$0xff]
  %v76 = vld [vmem:[%s5] sm:$0xff]
  %v77 = vld [vmem:[%s5 + $0x8] sm:$0xff]
  %v78 = vld [vmem:[%s5 + $0x10] sm:$0xff]
  %v79 = vld [vmem:[%s5 + $0x18] sm:$0xff]
  %vm80 = vcmask 261120
  %v82 = vsel %vm80, %v60, 0
  %v85 = vsel %vm80, %v61, 0
  %v88 = vsel %vm80, %v62, 0
  %v91 = vsel %vm80, %v63, 0
  %v94 = vsel %vm80, %v64, 0
  %v97 = vsel %vm80, %v65, 0
  %v100 = vsel %vm80, %v66, 0
  %v103 = vsel %vm80, %v67, 0
  %v106 = vsel %vm80, %v68, 0
  %v109 = vsel %vm80, %v69, 0
  %v112 = vsel %vm80, %v70, 0
  %v115 = vsel %vm80, %v71, 0
  %v118 = vsel %vm80, %v72, 0
  %v121 = vsel %vm80, %v73, 0
  %v124 = vsel %vm80, %v74, 0
  %v127 = vsel %vm80, %v75, 0
  %129 = vmatprep.subr.mxu0 0.0
  %130 = vmatpush1.msra.mxu0 %v76
  %131 = vmatprep.subr.mxu0 0.0
  %132 = vmatpush1.msra.mxu0 %v77
  %133 = vmatprep.subr.mxu0 0.0
  %134 = vmatpush1.msra.mxu0 %v78
  %135 = vmatprep.subr.mxu0 0.0
  %136 = vmatpush1.msra.mxu0 %v79
  %137 = vmatprep.subr.mxu0 0.0
  %138 = vmatpush1.msra.mxu0 0.0
  %139 = vmatprep.subr.mxu0 0.0
  %140 = vmatpush1.msra.mxu0 0.0
  %141 = vmatprep.subr.mxu0 0.0
  %142 = vmatpush1.msra.mxu0 0.0
  %143 = vmatprep.subr.mxu0 0.0
  %144 = vmatpush1.msra.mxu0 0.0
  %145 = vmatprep.subr.mxu0 0.0
  %146 = vmatpush1.msra.mxu0 0.0
  %147 = vmatprep.subr.mxu0 0.0
  %148 = vmatpush1.msra.mxu0 0.0
  %149 = vmatprep.subr.mxu0 0.0
  %150 = vmatpush1.msra.mxu0 0.0
  %151 = vmatprep.subr.mxu0 0.0
  %152 = vmatpush1.msra.mxu0 0.0
  %153 = vmatprep.subr.mxu0 0.0
  %154 = vmatpush1.msra.mxu0 0.0
  %155 = vmatprep.subr.mxu0 0.0
  %156 = vmatpush1.msra.mxu0 0.0
  %157 = vmatprep.subr.mxu0 0.0
  %158 = vmatpush1.msra.mxu0 0.0
  %159 = vmatprep.subr.mxu0 0.0
  %160 = vmatpush1.msra.mxu0 0.0
  %161 = vmatprep.subr.mxu0 0.0
  %162 = vmatpush1.msra.mxu0 0.0
  %163 = vmatprep.subr.mxu0 0.0
  %164 = vmatpush1.msra.mxu0 0.0
  %165 = vmatprep.subr.mxu0 0.0
  %166 = vmatpush1.msra.mxu0 0.0
  %167 = vmatprep.subr.mxu0 0.0
  %168 = vmatpush1.msra.mxu0 0.0
  %169 = vmatprep.subr.mxu0 0.0
  %170 = vmatpush1.msra.mxu0 0.0
  %171 = vmatprep.subr.mxu0 0.0
  %172 = vmatpush1.msra.mxu0 0.0
  %173 = vmatprep.subr.mxu0 0.0
  %174 = vmatpush1.msra.mxu0 0.0
  %175 = vmatprep.subr.mxu0 0.0
  %176 = vmatpush1.msra.mxu0 0.0
  %177 = vmatprep.subr.mxu0 0.0
  %178 = vmatpush1.msra.mxu0 0.0
  %179 = vmatprep.subr.mxu0 0.0
  %180 = vmatpush1.msra.mxu0 0.0
  %181 = vmatprep.subr.mxu0 0.0
  %182 = vmatpush1.msra.mxu0 0.0
  %183 = vmatprep.subr.mxu0 0.0
  %184 = vmatpush1.msra.mxu0 0.0
  %185 = vmatprep.subr.mxu0 0.0
  %186 = vmatpush1.msra.mxu0 0.0
  %187 = vmatprep.subr.mxu0 0.0
  %188 = vmatpush1.msra.mxu0 0.0
  %189 = vmatprep.subr.mxu0 0.0
  %190 = vmatpush1.msra.mxu0 0.0
  %191 = vmatprep.subr.mxu0 0.0
  %192 = vmatpush1.msra.mxu0 0.0
  %193 = vmatprep.mubr.f32.mxu0 0.0
  %194 = vmatmul.mubr.f32.gmra.mrb[0].mxu0 %v82
  %v195 = vpop.f32.mrb[0].mxu0
  %v196 = vadd.f32 0.0, %v195
  %v197 = vpop.f32.mrb[0].mxu0
  %198 = vmatprep.mubr.f32.mxu0 0.0
  %199 = vmatmul.mubr.f32.gmra.mrb[0].mxu0 %v85
  %v200 = vpop.f32.mrb[0].mxu0
  %v201 = vadd.f32 0.0, %v200
  %v202 = vpop.f32.mrb[0].mxu0
  %203 = vmatprep.mubr.f32.mxu0 0.0
  %204 = vmatmul.mubr.f32.gmra.mrb[0].mxu0 %v88
  %v205 = vpop.f32.mrb[0].mxu0
  %v206 = vadd.f32 0.0, %v205
  %v207 = vpop.f32.mrb[0].mxu0
  %208 = vmatprep.mubr.f32.mxu0 0.0
  %209 = vmatmul.mubr.f32.gmra.mrb[0].mxu0 %v91
  %v210 = vpop.f32.mrb[0].mxu0
  %v211 = vadd.f32 0.0, %v210
  %v212 = vpop.f32.mrb[0].mxu0
  %213 = vmatprep.mubr.f32.mxu0 0.0
  %214 = vmatmul.mubr.f32.gmra.mrb[0].mxu0 %v94
  %v215 = vpop.f32.mrb[0].mxu0
  %v216 = vadd.f32 0.0, %v215
  %v217 = vpop.f32.mrb[0].mxu0
  %218 = vmatprep.mubr.f32.mxu0 0.0
  %219 = vmatmul.mubr.f32.gmra.mrb[0].mxu0 %v97
  %v220 = vpop.f32.mrb[0].mxu0
  %v221 = vadd.f32 0.0, %v220
  %v222 = vpop.f32.mrb[0].mxu0
  %223 = vmatprep.mubr.f32.mxu0 0.0
  %224 = vmatmul.mubr.f32.gmra.mrb[0].mxu0 %v100
  %v225 = vpop.f32.mrb[0].mxu0
  %v226 = vadd.f32 0.0, %v225
  %v227 = vpop.f32.mrb[0].mxu0
  %228 = vmatprep.mubr.f32.mxu0 0.0
  %229 = vmatmul.mubr.f32.gmra.mrb[0].mxu0 %v103
  %v230 = vpop.f32.mrb[0].mxu0
  %v231 = vadd.f32 0.0, %v230
  %v232 = vpop.f32.mrb[0].mxu0
  %233 = vmatprep.mubr.f32.mxu0 0.0
  %234 = vmatmul.mubr.f32.gmra.mrb[0].mxu0 %v106
  %v235 = vpop.f32.mrb[0].mxu0
  %v236 = vadd.f32 0.0, %v235
  %v237 = vpop.f32.mrb[0].mxu0
  %238 = vmatprep.mubr.f32.mxu0 0.0
  %239 = vmatmul.mubr.f32.gmra.mrb[0].mxu0 %v109
  %v240 = vpop.f32.mrb[0].mxu0
  %v241 = vadd.f32 0.0, %v240
  %v242 = vpop.f32.mrb[0].mxu0
  %243 = vmatprep.mubr.f32.mxu0 0.0
  %244 = vmatmul.mubr.f32.gmra.mrb[0].mxu0 %v112
  %v245 = vpop.f32.mrb[0].mxu0
  %v246 = vadd.f32 0.0, %v245
  %v247 = vpop.f32.mrb[0].mxu0
  %248 = vmatprep.mubr.f32.mxu0 0.0
  %249 = vmatmul.mubr.f32.gmra.mrb[0].mxu0 %v115
  %v250 = vpop.f32.mrb[0].mxu0
  %v251 = vadd.f32 0.0, %v250
  %v252 = vpop.f32.mrb[0].mxu0
  %253 = vmatprep.mubr.f32.mxu0 0.0
  %254 = vmatmul.mubr.f32.gmra.mrb[0].mxu0 %v118
  %v255 = vpop.f32.mrb[0].mxu0
  %v256 = vadd.f32 0.0, %v255
  %v257 = vpop.f32.mrb[0].mxu0
  %258 = vmatprep.mubr.f32.mxu0 0.0
  %259 = vmatmul.mubr.f32.gmra.mrb[0].mxu0 %v121
  %v260 = vpop.f32.mrb[0].mxu0
  %v261 = vadd.f32 0.0, %v260
  %v262 = vpop.f32.mrb[0].mxu0
  %263 = vmatprep.mubr.f32.mxu0 0.0
  %264 = vmatmul.mubr.f32.gmra.mrb[0].mxu0 %v124
  %v265 = vpop.f32.mrb[0].mxu0
  %v266 = vadd.f32 0.0, %v265
  %v267 = vpop.f32.mrb[0].mxu0
  %268 = vmatprep.mubr.f32.mxu0 0.0
  %269 = vmatmul.mubr.f32.gmra.mrb[0].mxu0 %v127
  %v270 = vpop.f32.mrb[0].mxu0
  %v271 = vadd.f32 0.0, %v270
  %v272 = vpop.f32.mrb[0].mxu0
  %273 = vdwg.mxu0
  %v275 = vsel %vm80, %v40, 0
  %v278 = vsel %vm80, %v41, 0
  %v281 = vsel %vm80, %v42, 0
  %v284 = vsel %vm80, %v43, 0
  %v287 = vsel %vm80, %v44, 0
  %v290 = vsel %vm80, %v45, 0
  %v293 = vsel %vm80, %v46, 0
  %v296 = vsel %vm80, %v47, 0
  %v299 = vsel %vm80, %v48, 0
  %v302 = vsel %vm80, %v49, 0
  %v305 = vsel %vm80, %v50, 0
  %v308 = vsel %vm80, %v51, 0
  %v311 = vsel %vm80, %v52, 0
  %v314 = vsel %vm80, %v53, 0
  %v317 = vsel %vm80, %v54, 0
  %v320 = vsel %vm80, %v55, 0
  %322 = vmatprep.subr.mxu0 0.0
  %323 = vmatpush1.msra.mxu0 %v56
  %324 = vmatprep.subr.mxu0 0.0
  %325 = vmatpush1.msra.mxu0 %v57
  %326 = vmatprep.subr.mxu0 0.0
  %327 = vmatpush1.msra.mxu0 %v58
  %328 = vmatprep.subr.mxu0 0.0
  %329 = vmatpush1.msra.mxu0 %v59
  %330 = vmatprep.subr.mxu0 0.0
  %331 = vmatpush1.msra.mxu0 0.0
  %332 = vmatprep.subr.mxu0 0.0
  %333 = vmatpush1.msra.mxu0 0.0
  %334 = vmatprep.subr.mxu0 0.0
  %335 = vmatpush1.msra.mxu0 0.0
  %336 = vmatprep.subr.mxu0 0.0
  %337 = vmatpush1.msra.mxu0 0.0
  %338 = vmatprep.subr.mxu0 0.0
  %339 = vmatpush1.msra.mxu0 0.0
  %340 = vmatprep.subr.mxu0 0.0
  %341 = vmatpush1.msra.mxu0 0.0
  %342 = vmatprep.subr.mxu0 0.0
  %343 = vmatpush1.msra.mxu0 0.0
  %344 = vmatprep.subr.mxu0 0.0
  %345 = vmatpush1.msra.mxu0 0.0
  %346 = vmatprep.subr.mxu0 0.0
  %347 = vmatpush1.msra.mxu0 0.0
  %348 = vmatprep.subr.mxu0 0.0
  %349 = vmatpush1.msra.mxu0 0.0
  %350 = vmatprep.subr.mxu0 0.0
  %351 = vmatpush1.msra.mxu0 0.0
  %352 = vmatprep.subr.mxu0 0.0
  %353 = vmatpush1.msra.mxu0 0.0
  %354 = vmatprep.subr.mxu0 0.0
  %355 = vmatpush1.msra.mxu0 0.0
  %356 = vmatprep.subr.mxu0 0.0
  %357 = vmatpush1.msra.mxu0 0.0
  %358 = vmatprep.subr.mxu0 0.0
  %359 = vmatpush1.msra.mxu0 0.0
  %360 = vmatprep.subr.mxu0 0.0
  %361 = vmatpush1.msra.mxu0 0.0
  %362 = vmatprep.subr.mxu0 0.0
  %363 = vmatpush1.msra.mxu0 0.0
  %364 = vmatprep.subr.mxu0 0.0
  %365 = vmatpush1.msra.mxu0 0.0
  %366 = vmatprep.subr.mxu0 0.0
  %367 = vmatpush1.msra.mxu0 0.0
  %368 = vmatprep.subr.mxu0 0.0
  %369 = vmatpush1.msra.mxu0 0.0
  %370 = vmatprep.subr.mxu0 0.0
  %371 = vmatpush1.msra.mxu0 0.0
  %372 = vmatprep.subr.mxu0 0.0
  %373 = vmatpush1.msra.mxu0 0.0
  %374 = vmatprep.subr.mxu0 0.0
  %375 = vmatpush1.msra.mxu0 0.0
  %376 = vmatprep.subr.mxu0 0.0
  %377 = vmatpush1.msra.mxu0 0.0
  %378 = vmatprep.subr.mxu0 0.0
  %379 = vmatpush1.msra.mxu0 0.0
  %380 = vmatprep.subr.mxu0 0.0
  %381 = vmatpush1.msra.mxu0 0.0
  %382 = vmatprep.subr.mxu0 0.0
  %383 = vmatpush1.msra.mxu0 0.0
  %384 = vmatprep.subr.mxu0 0.0
  %385 = vmatpush1.msra.mxu0 0.0
  %386 = vmatprep.mubr.f32.mxu0 0.0
  %387 = vmatmul.mubr.f32.gmra.mrb[0].mxu0 %v275
  %v388 = vpop.f32.mrb[0].mxu0
  %v389 = vadd.f32 %v196, %v388
  %v390 = vpop.f32.mrb[0].mxu0
  %391 = vmatprep.mubr.f32.mxu0 0.0
  %392 = vmatmul.mubr.f32.gmra.mrb[0].mxu0 %v278
  %v393 = vpop.f32.mrb[0].mxu0
  %v394 = vadd.f32 %v201, %v393
  %v395 = vpop.f32.mrb[0].mxu0
  %396 = vmatprep.mubr.f32.mxu0 0.0
  %397 = vmatmul.mubr.f32.gmra.mrb[0].mxu0 %v281
  %v398 = vpop.f32.mrb[0].mxu0
  %v399 = vadd.f32 %v206, %v398
  %v400 = vpop.f32.mrb[0].mxu0
  %401 = vmatprep.mubr.f32.mxu0 0.0
  %402 = vmatmul.mubr.f32.gmra.mrb[0].mxu0 %v284
  %v403 = vpop.f32.mrb[0].mxu0
  %v404 = vadd.f32 %v211, %v403
  %v405 = vpop.f32.mrb[0].mxu0
  %406 = vmatprep.mubr.f32.mxu0 0.0
  %407 = vmatmul.mubr.f32.gmra.mrb[0].mxu0 %v287
  %v408 = vpop.f32.mrb[0].mxu0
  %v409 = vadd.f32 %v216, %v408
  %v410 = vpop.f32.mrb[0].mxu0
  %411 = vmatprep.mubr.f32.mxu0 0.0
  %412 = vmatmul.mubr.f32.gmra.mrb[0].mxu0 %v290
  %v413 = vpop.f32.mrb[0].mxu0
  %v414 = vadd.f32 %v221, %v413
  %v415 = vpop.f32.mrb[0].mxu0
  %416 = vmatprep.mubr.f32.mxu0 0.0
  %417 = vmatmul.mubr.f32.gmra.mrb[0].mxu0 %v293
  %v418 = vpop.f32.mrb[0].mxu0
  %v419 = vadd.f32 %v226, %v418
  %v420 = vpop.f32.mrb[0].mxu0
  %421 = vmatprep.mubr.f32.mxu0 0.0
  %422 = vmatmul.mubr.f32.gmra.mrb[0].mxu0 %v296
  %v423 = vpop.f32.mrb[0].mxu0
  %v424 = vadd.f32 %v231, %v423
  %v425 = vpop.f32.mrb[0].mxu0
  %426 = vmatprep.mubr.f32.mxu0 0.0
  %427 = vmatmul.mubr.f32.gmra.mrb[0].mxu0 %v299
  %v428 = vpop.f32.mrb[0].mxu0
  %v429 = vadd.f32 %v236, %v428
  %v430 = vpop.f32.mrb[0].mxu0
  %431 = vmatprep.mubr.f32.mxu0 0.0
  %432 = vmatmul.mubr.f32.gmra.mrb[0].mxu0 %v302
  %v433 = vpop.f32.mrb[0].mxu0
  %v434 = vadd.f32 %v241, %v433
  %v435 = vpop.f32.mrb[0].mxu0
  %436 = vmatprep.mubr.f32.mxu0 0.0
  %437 = vmatmul.mubr.f32.gmra.mrb[0].mxu0 %v305
  %v438 = vpop.f32.mrb[0].mxu0
  %v439 = vadd.f32 %v246, %v438
  %v440 = vpop.f32.mrb[0].mxu0
  %441 = vmatprep.mubr.f32.mxu0 0.0
  %442 = vmatmul.mubr.f32.gmra.mrb[0].mxu0 %v308
  %v443 = vpop.f32.mrb[0].mxu0
  %v444 = vadd.f32 %v251, %v443
  %v445 = vpop.f32.mrb[0].mxu0
  %446 = vmatprep.mubr.f32.mxu0 0.0
  %447 = vmatmul.mubr.f32.gmra.mrb[0].mxu0 %v311
  %v448 = vpop.f32.mrb[0].mxu0
  %v449 = vadd.f32 %v256, %v448
  %v450 = vpop.f32.mrb[0].mxu0
  %451 = vmatprep.mubr.f32.mxu0 0.0
  %452 = vmatmul.mubr.f32.gmra.mrb[0].mxu0 %v314
  %v453 = vpop.f32.mrb[0].mxu0
  %v454 = vadd.f32 %v261, %v453
  %v455 = vpop.f32.mrb[0].mxu0
  %456 = vmatprep.mubr.f32.mxu0 0.0
  %457 = vmatmul.mubr.f32.gmra.mrb[0].mxu0 %v317
  %v458 = vpop.f32.mrb[0].mxu0
  %v459 = vadd.f32 %v266, %v458
  %v460 = vpop.f32.mrb[0].mxu0
  %461 = vmatprep.mubr.f32.mxu0 0.0
  %462 = vmatmul.mubr.f32.gmra.mrb[0].mxu0 %v320
  %v463 = vpop.f32.mrb[0].mxu0
  %v464 = vadd.f32 %v271, %v463
  %v465 = vpop.f32.mrb[0].mxu0
  %466 = vdwg.mxu0
  %v467 = vld [vmem:[%s2] sm:$0xff]
  %v468 = vld [vmem:[%s2 + $0x8] sm:$0xff]
  %v469 = vld [vmem:[%s2 + $0x10] sm:$0xff]
  %v470 = vld [vmem:[%s2 + $0x18] sm:$0xff]
  %v471 = vld [vmem:[%s2 + $0x20] sm:$0xff]
  %v472 = vld [vmem:[%s2 + $0x28] sm:$0xff]
  %v473 = vld [vmem:[%s2 + $0x30] sm:$0xff]
  %v474 = vld [vmem:[%s2 + $0x38] sm:$0xff]
  %v475 = vld [vmem:[%s2 + $0x40] sm:$0xff]
  %v476 = vld [vmem:[%s2 + $0x48] sm:$0xff]
  %v477 = vld [vmem:[%s2 + $0x50] sm:$0xff]
  %v478 = vld [vmem:[%s2 + $0x58] sm:$0xff]
  %v479 = vld [vmem:[%s2 + $0x60] sm:$0xff]
  %v480 = vld [vmem:[%s2 + $0x68] sm:$0xff]
  %v481 = vld [vmem:[%s2 + $0x70] sm:$0xff]
  %v482 = vld [vmem:[%s2 + $0x78] sm:$0xff]
  %v483 = vld [vmem:[%s6] sm:$0xff]
  %v484 = vld [vmem:[%s6 + $0x8] sm:$0xff]
  %vm485 = vcmask 130048
  %v487 = vsel %vm485, %v467, 0
  %v490 = vsel %vm485, %v468, 0
  %v493 = vsel %vm485, %v469, 0
  %v496 = vsel %vm485, %v470, 0
  %v499 = vsel %vm485, %v471, 0
  %v502 = vsel %vm485, %v472, 0
  %v505 = vsel %vm485, %v473, 0
  %v508 = vsel %vm485, %v474, 0
  %v511 = vsel %vm485, %v475, 0
  %v514 = vsel %vm485, %v476, 0
  %v517 = vsel %vm485, %v477, 0
  %v520 = vsel %vm485, %v478, 0
  %v523 = vsel %vm485, %v479, 0
  %v526 = vsel %vm485, %v480, 0
  %v529 = vsel %vm485, %v481, 0
  %v532 = vsel %vm485, %v482, 0
  %534 = vmatprep.subr.mxu0 0.0
  %535 = vmatpush1.msra.mxu0 %v483
  %536 = vmatprep.subr.mxu0 0.0
  %537 = vmatpush1.msra.mxu0 %v484
  %538 = vmatprep.subr.mxu0 0.0
  %539 = vmatpush1.msra.mxu0 0.0
  %540 = vmatprep.subr.mxu0 0.0
  %541 = vmatpush1.msra.mxu0 0.0
  %542 = vmatprep.subr.mxu0 0.0
  %543 = vmatpush1.msra.mxu0 0.0
  %544 = vmatprep.subr.mxu0 0.0
  %545 = vmatpush1.msra.mxu0 0.0
  %546 = vmatprep.subr.mxu0 0.0
  %547 = vmatpush1.msra.mxu0 0.0
  %548 = vmatprep.subr.mxu0 0.0
  %549 = vmatpush1.msra.mxu0 0.0
  %550 = vmatprep.subr.mxu0 0.0
  %551 = vmatpush1.msra.mxu0 0.0
  %552 = vmatprep.subr.mxu0 0.0
  %553 = vmatpush1.msra.mxu0 0.0
  %554 = vmatprep.subr.mxu0 0.0
  %555 = vmatpush1.msra.mxu0 0.0
  %556 = vmatprep.subr.mxu0 0.0
  %557 = vmatpush1.msra.mxu0 0.0
  %558 = vmatprep.subr.mxu0 0.0
  %559 = vmatpush1.msra.mxu0 0.0
  %560 = vmatprep.subr.mxu0 0.0
  %561 = vmatpush1.msra.mxu0 0.0
  %562 = vmatprep.subr.mxu0 0.0
  %563 = vmatpush1.msra.mxu0 0.0
  %564 = vmatprep.subr.mxu0 0.0
  %565 = vmatpush1.msra.mxu0 0.0
  %566 = vmatprep.subr.mxu0 0.0
  %567 = vmatpush1.msra.mxu0 0.0
  %568 = vmatprep.subr.mxu0 0.0
  %569 = vmatpush1.msra.mxu0 0.0
  %570 = vmatprep.subr.mxu0 0.0
  %571 = vmatpush1.msra.mxu0 0.0
  %572 = vmatprep.subr.mxu0 0.0
  %573 = vmatpush1.msra.mxu0 0.0
  %574 = vmatprep.subr.mxu0 0.0
  %575 = vmatpush1.msra.mxu0 0.0
  %576 = vmatprep.subr.mxu0 0.0
  %577 = vmatpush1.msra.mxu0 0.0
  %578 = vmatprep.subr.mxu0 0.0
  %579 = vmatpush1.msra.mxu0 0.0
  %580 = vmatprep.subr.mxu0 0.0
  %581 = vmatpush1.msra.mxu0 0.0
  %582 = vmatprep.subr.mxu0 0.0
  %583 = vmatpush1.msra.mxu0 0.0
  %584 = vmatprep.subr.mxu0 0.0
  %585 = vmatpush1.msra.mxu0 0.0
  %586 = vmatprep.subr.mxu0 0.0
  %587 = vmatpush1.msra.mxu0 0.0
  %588 = vmatprep.subr.mxu0 0.0
  %589 = vmatpush1.msra.mxu0 0.0
  %590 = vmatprep.subr.mxu0 0.0
  %591 = vmatpush1.msra.mxu0 0.0
  %592 = vmatprep.subr.mxu0 0.0
  %593 = vmatpush1.msra.mxu0 0.0
  %594 = vmatprep.subr.mxu0 0.0
  %595 = vmatpush1.msra.mxu0 0.0
  %596 = vmatprep.subr.mxu0 0.0
  %597 = vmatpush1.msra.mxu0 0.0
  %598 = vmatprep.mubr.f32.mxu0 0.0
  %599 = vmatmul.mubr.f32.gmra.mrb[0].mxu0 %v487
  %v600 = vpop.f32.mrb[0].mxu0
  %v601 = vadd.f32 0.0, %v600
  %v602 = vpop.f32.mrb[0].mxu0
  %603 = vmatprep.mubr.f32.mxu0 0.0
  %604 = vmatmul.mubr.f32.gmra.mrb[0].mxu0 %v490
  %v605 = vpop.f32.mrb[0].mxu0
  %v606 = vadd.f32 0.0, %v605
  %v607 = vpop.f32.mrb[0].mxu0
  %608 = vmatprep.mubr.f32.mxu0 0.0
  %609 = vmatmul.mubr.f32.gmra.mrb[0].mxu0 %v493
  %v610 = vpop.f32.mrb[0].mxu0
  %v611 = vadd.f32 0.0, %v610
  %v612 = vpop.f32.mrb[0].mxu0
  %613 = vmatprep.mubr.f32.mxu0 0.0
  %614 = vmatmul.mubr.f32.gmra.mrb[0].mxu0 %v496
  %v615 = vpop.f32.mrb[0].mxu0
  %v616 = vadd.f32 0.0, %v615
  %v617 = vpop.f32.mrb[0].mxu0
  %618 = vmatprep.mubr.f32.mxu0 0.0
  %619 = vmatmul.mubr.f32.gmra.mrb[0].mxu0 %v499
  %v620 = vpop.f32.mrb[0].mxu0
  %v621 = vadd.f32 0.0, %v620
  %v622 = vpop.f32.mrb[0].mxu0
  %623 = vmatprep.mubr.f32.mxu0 0.0
  %624 = vmatmul.mubr.f32.gmra.mrb[0].mxu0 %v502
  %v625 = vpop.f32.mrb[0].mxu0
  %v626 = vadd.f32 0.0, %v625
  %v627 = vpop.f32.mrb[0].mxu0
  %628 = vmatprep.mubr.f32.mxu0 0.0
  %629 = vmatmul.mubr.f32.gmra.mrb[0].mxu0 %v505
  %v630 = vpop.f32.mrb[0].mxu0
  %v631 = vadd.f32 0.0, %v630
  %v632 = vpop.f32.mrb[0].mxu0
  %633 = vmatprep.mubr.f32.mxu0 0.0
  %634 = vmatmul.mubr.f32.gmra.mrb[0].mxu0 %v508
  %v635 = vpop.f32.mrb[0].mxu0
  %v636 = vadd.f32 0.0, %v635
  %v637 = vpop.f32.mrb[0].mxu0
  %638 = vmatprep.mubr.f32.mxu0 0.0
  %639 = vmatmul.mubr.f32.gmra.mrb[0].mxu0 %v511
  %v640 = vpop.f32.mrb[0].mxu0
  %v641 = vadd.f32 0.0, %v640
  %v642 = vpop.f32.mrb[0].mxu0
  %643 = vmatprep.mubr.f32.mxu0 0.0
  %644 = vmatmul.mubr.f32.gmra.mrb[0].mxu0 %v514
  %v645 = vpop.f32.mrb[0].mxu0
  %v646 = vadd.f32 0.0, %v645
  %v647 = vpop.f32.mrb[0].mxu0
  %648 = vmatprep.mubr.f32.mxu0 0.0
  %649 = vmatmul.mubr.f32.gmra.mrb[0].mxu0 %v517
  %v650 = vpop.f32.mrb[0].mxu0
  %v651 = vadd.f32 0.0, %v650
  %v652 = vpop.f32.mrb[0].mxu0
  %653 = vmatprep.mubr.f32.mxu0 0.0
  %654 = vmatmul.mubr.f32.gmra.mrb[0].mxu0 %v520
  %v655 = vpop.f32.mrb[0].mxu0
  %v656 = vadd.f32 0.0, %v655
  %v657 = vpop.f32.mrb[0].mxu0
  %658 = vmatprep.mubr.f32.mxu0 0.0
  %659 = vmatmul.mubr.f32.gmra.mrb[0].mxu0 %v523
  %v660 = vpop.f32.mrb[0].mxu0
  %v661 = vadd.f32 0.0, %v660
  %v662 = vpop.f32.mrb[0].mxu0
  %663 = vmatprep.mubr.f32.mxu0 0.0
  %664 = vmatmul.mubr.f32.gmra.mrb[0].mxu0 %v526
  %v665 = vpop.f32.mrb[0].mxu0
  %v666 = vadd.f32 0.0, %v665
  %v667 = vpop.f32.mrb[0].mxu0
  %668 = vmatprep.mubr.f32.mxu0 0.0
  %669 = vmatmul.mubr.f32.gmra.mrb[0].mxu0 %v529
  %v670 = vpop.f32.mrb[0].mxu0
  %v671 = vadd.f32 0.0, %v670
  %v672 = vpop.f32.mrb[0].mxu0
  %673 = vmatprep.mubr.f32.mxu0 0.0
  %674 = vmatmul.mubr.f32.gmra.mrb[0].mxu0 %v532
  %v675 = vpop.f32.mrb[0].mxu0
  %v676 = vadd.f32 0.0, %v675
  %v677 = vpop.f32.mrb[0].mxu0
  %678 = vdwg.mxu0
  %v679 = vadd.f32 %v389, %v601
  %v680 = vadd.f32 %v394, %v606
  %v681 = vadd.f32 %v399, %v611
  %v682 = vadd.f32 %v404, %v616
  %v683 = vadd.f32 %v409, %v621
  %v684 = vadd.f32 %v414, %v626
  %v685 = vadd.f32 %v419, %v631
  %v686 = vadd.f32 %v424, %v636
  %v687 = vadd.f32 %v429, %v641
  %v688 = vadd.f32 %v434, %v646
  %v689 = vadd.f32 %v439, %v651
  %v690 = vadd.f32 %v444, %v656
  %v691 = vadd.f32 %v449, %v661
  %v692 = vadd.f32 %v454, %v666
  %v693 = vadd.f32 %v459, %v671
  %v694 = vadd.f32 %v464, %v676
  %v695 = vld [vmem:[%s3] sm:$0xff]
  %v696 = vld [vmem:[%s3 + $0x8] sm:$0xff]
  %v697 = vld [vmem:[%s3 + $0x10] sm:$0xff]
  %v698 = vld [vmem:[%s3 + $0x18] sm:$0xff]
  %v699 = vld [vmem:[%s3 + $0x20] sm:$0xff]
  %v700 = vld [vmem:[%s3 + $0x28] sm:$0xff]
  %v701 = vld [vmem:[%s3 + $0x30] sm:$0xff]
  %v702 = vld [vmem:[%s3 + $0x38] sm:$0xff]
  %v703 = vld [vmem:[%s3 + $0x40] sm:$0xff]
  %v704 = vld [vmem:[%s3 + $0x48] sm:$0xff]
  %v705 = vld [vmem:[%s3 + $0x50] sm:$0xff]
  %v706 = vld [vmem:[%s3 + $0x58] sm:$0xff]
  %v707 = vld [vmem:[%s3 + $0x60] sm:$0xff]
  %v708 = vld [vmem:[%s3 + $0x68] sm:$0xff]
  %v709 = vld [vmem:[%s3 + $0x70] sm:$0xff]
  %v710 = vld [vmem:[%s3 + $0x78] sm:$0xff]
  %v711 = vld [vmem:[%s7] sm:$0xff]
  %v712 = vld [vmem:[%s7 + $0x8] sm:$0xff]
  %v714 = vsel %vm485, %v695, 0
  %v717 = vsel %vm485, %v696, 0
  %v720 = vsel %vm485, %v697, 0
  %v723 = vsel %vm485, %v698, 0
  %v726 = vsel %vm485, %v699, 0
  %v729 = vsel %vm485, %v700, 0
  %v732 = vsel %vm485, %v701, 0
  %v735 = vsel %vm485, %v702, 0
  %v738 = vsel %vm485, %v703, 0
  %v741 = vsel %vm485, %v704, 0
  %v744 = vsel %vm485, %v705, 0
  %v747 = vsel %vm485, %v706, 0
  %v750 = vsel %vm485, %v707, 0
  %v753 = vsel %vm485, %v708, 0
  %v756 = vsel %vm485, %v709, 0
  %v759 = vsel %vm485, %v710, 0
  %761 = vmatprep.subr.mxu0 0.0
  %762 = vmatpush1.msra.mxu0 %v711
  %763 = vmatprep.subr.mxu0 0.0
  %764 = vmatpush1.msra.mxu0 %v712
  %765 = vmatprep.subr.mxu0 0.0
  %766 = vmatpush1.msra.mxu0 0.0
  %767 = vmatprep.subr.mxu0 0.0
  %768 = vmatpush1.msra.mxu0 0.0
  %769 = vmatprep.subr.mxu0 0.0
  %770 = vmatpush1.msra.mxu0 0.0
  %771 = vmatprep.subr.mxu0 0.0
  %772 = vmatpush1.msra.mxu0 0.0
  %773 = vmatprep.subr.mxu0 0.0
  %774 = vmatpush1.msra.mxu0 0.0
  %775 = vmatprep.subr.mxu0 0.0
  %776 = vmatpush1.msra.mxu0 0.0
  %777 = vmatprep.subr.mxu0 0.0
  %778 = vmatpush1.msra.mxu0 0.0
  %779 = vmatprep.subr.mxu0 0.0
  %780 = vmatpush1.msra.mxu0 0.0
  %781 = vmatprep.subr.mxu0 0.0
  %782 = vmatpush1.msra.mxu0 0.0
  %783 = vmatprep.subr.mxu0 0.0
  %784 = vmatpush1.msra.mxu0 0.0
  %785 = vmatprep.subr.mxu0 0.0
  %786 = vmatpush1.msra.mxu0 0.0
  %787 = vmatprep.subr.mxu0 0.0
  %788 = vmatpush1.msra.mxu0 0.0
  %789 = vmatprep.subr.mxu0 0.0
  %790 = vmatpush1.msra.mxu0 0.0
  %791 = vmatprep.subr.mxu0 0.0
  %792 = vmatpush1.msra.mxu0 0.0
  %793 = vmatprep.subr.mxu0 0.0
  %794 = vmatpush1.msra.mxu0 0.0
  %795 = vmatprep.subr.mxu0 0.0
  %796 = vmatpush1.msra.mxu0 0.0
  %797 = vmatprep.subr.mxu0 0.0
  %798 = vmatpush1.msra.mxu0 0.0
  %799 = vmatprep.subr.mxu0 0.0
  %800 = vmatpush1.msra.mxu0 0.0
  %801 = vmatprep.subr.mxu0 0.0
  %802 = vmatpush1.msra.mxu0 0.0
  %803 = vmatprep.subr.mxu0 0.0
  %804 = vmatpush1.msra.mxu0 0.0
  %805 = vmatprep.subr.mxu0 0.0
  %806 = vmatpush1.msra.mxu0 0.0
  %807 = vmatprep.subr.mxu0 0.0
  %808 = vmatpush1.msra.mxu0 0.0
  %809 = vmatprep.subr.mxu0 0.0
  %810 = vmatpush1.msra.mxu0 0.0
  %811 = vmatprep.subr.mxu0 0.0
  %812 = vmatpush1.msra.mxu0 0.0
  %813 = vmatprep.subr.mxu0 0.0
  %814 = vmatpush1.msra.mxu0 0.0
  %815 = vmatprep.subr.mxu0 0.0
  %816 = vmatpush1.msra.mxu0 0.0
  %817 = vmatprep.subr.mxu0 0.0
  %818 = vmatpush1.msra.mxu0 0.0
  %819 = vmatprep.subr.mxu0 0.0
  %820 = vmatpush1.msra.mxu0 0.0
  %821 = vmatprep.subr.mxu0 0.0
  %822 = vmatpush1.msra.mxu0 0.0
  %823 = vmatprep.subr.mxu0 0.0
  %824 = vmatpush1.msra.mxu0 0.0
  %825 = vmatprep.mubr.f32.mxu0 0.0
  %826 = vmatmul.mubr.f32.gmra.mrb[0].mxu0 %v714
  %v827 = vpop.f32.mrb[0].mxu0
  %v828 = vadd.f32 0.0, %v827
  %v829 = vpop.f32.mrb[0].mxu0
  %830 = vmatprep.mubr.f32.mxu0 0.0
  %831 = vmatmul.mubr.f32.gmra.mrb[0].mxu0 %v717
  %v832 = vpop.f32.mrb[0].mxu0
  %v833 = vadd.f32 0.0, %v832
  %v834 = vpop.f32.mrb[0].mxu0
  %835 = vmatprep.mubr.f32.mxu0 0.0
  %836 = vmatmul.mubr.f32.gmra.mrb[0].mxu0 %v720
  %v837 = vpop.f32.mrb[0].mxu0
  %v838 = vadd.f32 0.0, %v837
  %v839 = vpop.f32.mrb[0].mxu0
  %840 = vmatprep.mubr.f32.mxu0 0.0
  %841 = vmatmul.mubr.f32.gmra.mrb[0].mxu0 %v723
  %v842 = vpop.f32.mrb[0].mxu0
  %v843 = vadd.f32 0.0, %v842
  %v844 = vpop.f32.mrb[0].mxu0
  %845 = vmatprep.mubr.f32.mxu0 0.0
  %846 = vmatmul.mubr.f32.gmra.mrb[0].mxu0 %v726
  %v847 = vpop.f32.mrb[0].mxu0
  %v848 = vadd.f32 0.0, %v847
  %v849 = vpop.f32.mrb[0].mxu0
  %850 = vmatprep.mubr.f32.mxu0 0.0
  %851 = vmatmul.mubr.f32.gmra.mrb[0].mxu0 %v729
  %v852 = vpop.f32.mrb[0].mxu0
  %v853 = vadd.f32 0.0, %v852
  %v854 = vpop.f32.mrb[0].mxu0
  %855 = vmatprep.mubr.f32.mxu0 0.0
  %856 = vmatmul.mubr.f32.gmra.mrb[0].mxu0 %v732
  %v857 = vpop.f32.mrb[0].mxu0
  %v858 = vadd.f32 0.0, %v857
  %v859 = vpop.f32.mrb[0].mxu0
  %860 = vmatprep.mubr.f32.mxu0 0.0
  %861 = vmatmul.mubr.f32.gmra.mrb[0].mxu0 %v735
  %v862 = vpop.f32.mrb[0].mxu0
  %v863 = vadd.f32 0.0, %v862
  %v864 = vpop.f32.mrb[0].mxu0
  %865 = vmatprep.mubr.f32.mxu0 0.0
  %866 = vmatmul.mubr.f32.gmra.mrb[0].mxu0 %v738
  %v867 = vpop.f32.mrb[0].mxu0
  %v868 = vadd.f32 0.0, %v867
  %v869 = vpop.f32.mrb[0].mxu0
  %870 = vmatprep.mubr.f32.mxu0 0.0
  %871 = vmatmul.mubr.f32.gmra.mrb[0].mxu0 %v741
  %v872 = vpop.f32.mrb[0].mxu0
  %v873 = vadd.f32 0.0, %v872
  %v874 = vpop.f32.mrb[0].mxu0
  %875 = vmatprep.mubr.f32.mxu0 0.0
  %876 = vmatmul.mubr.f32.gmra.mrb[0].mxu0 %v744
  %v877 = vpop.f32.mrb[0].mxu0
  %v878 = vadd.f32 0.0, %v877
  %v879 = vpop.f32.mrb[0].mxu0
  %880 = vmatprep.mubr.f32.mxu0 0.0
  %881 = vmatmul.mubr.f32.gmra.mrb[0].mxu0 %v747
  %v882 = vpop.f32.mrb[0].mxu0
  %v883 = vadd.f32 0.0, %v882
  %v884 = vpop.f32.mrb[0].mxu0
  %885 = vmatprep.mubr.f32.mxu0 0.0
  %886 = vmatmul.mubr.f32.gmra.mrb[0].mxu0 %v750
  %v887 = vpop.f32.mrb[0].mxu0
  %v888 = vadd.f32 0.0, %v887
  %v889 = vpop.f32.mrb[0].mxu0
  %890 = vmatprep.mubr.f32.mxu0 0.0
  %891 = vmatmul.mubr.f32.gmra.mrb[0].mxu0 %v753
  %v892 = vpop.f32.mrb[0].mxu0
  %v893 = vadd.f32 0.0, %v892
  %v894 = vpop.f32.mrb[0].mxu0
  %895 = vmatprep.mubr.f32.mxu0 0.0
  %896 = vmatmul.mubr.f32.gmra.mrb[0].mxu0 %v756
  %v897 = vpop.f32.mrb[0].mxu0
  %v898 = vadd.f32 0.0, %v897
  %v899 = vpop.f32.mrb[0].mxu0
  %900 = vmatprep.mubr.f32.mxu0 0.0
  %901 = vmatmul.mubr.f32.gmra.mrb[0].mxu0 %v759
  %v902 = vpop.f32.mrb[0].mxu0
  %v903 = vadd.f32 0.0, %v902
  %v904 = vpop.f32.mrb[0].mxu0
  %905 = vdwg.mxu0
  %v906 = vadd.f32 %v679, %v828
  %v907 = vadd.f32 %v680, %v833
  %v908 = vadd.f32 %v681, %v838
  %v909 = vadd.f32 %v682, %v843
  %v910 = vadd.f32 %v683, %v848
  %v911 = vadd.f32 %v684, %v853
  %v912 = vadd.f32 %v685, %v858
  %v913 = vadd.f32 %v686, %v863
  %v914 = vadd.f32 %v687, %v868
  %v915 = vadd.f32 %v688, %v873
  %v916 = vadd.f32 %v689, %v878
  %v917 = vadd.f32 %v690, %v883
  %v918 = vadd.f32 %v691, %v888
  %v919 = vadd.f32 %v692, %v893
  %v920 = vadd.f32 %v693, %v898
  %v921 = vadd.f32 %v694, %v903
  %v922 = vld [vmem:[%s8] sm:$0x1]
  %v924 = vlaneseq
  %v925 = vshrl.u32 %v924, 7
  %v926 = vsub.s32 0, %v925
  %v927 = vrot.slane %v922, %v926
  %v929 = vadd.f32 %v906, %v927
  %v930 = vadd.f32 %v907, %v927
  %v931 = vadd.f32 %v908, %v927
  %v932 = vadd.f32 %v909, %v927
  %v933 = vadd.f32 %v910, %v927
  %v934 = vadd.f32 %v911, %v927
  %v935 = vadd.f32 %v912, %v927
  %v936 = vadd.f32 %v913, %v927
  %v937 = vadd.f32 %v914, %v927
  %v938 = vadd.f32 %v915, %v927
  %v939 = vadd.f32 %v916, %v927
  %v940 = vadd.f32 %v917, %v927
  %v941 = vadd.f32 %v918, %v927
  %v942 = vadd.f32 %v919, %v927
  %v943 = vadd.f32 %v920, %v927
  %v944 = vadd.f32 %v921, %v927
  %v945 = vmax.f32 %v929, 0.0
  %v946 = vmax.f32 %v930, 0.0
  %v947 = vmax.f32 %v931, 0.0
  %v948 = vmax.f32 %v932, 0.0
  %v949 = vmax.f32 %v933, 0.0
  %v950 = vmax.f32 %v934, 0.0
  %v951 = vmax.f32 %v935, 0.0
  %v952 = vmax.f32 %v936, 0.0
  %v953 = vmax.f32 %v937, 0.0
  %v954 = vmax.f32 %v938, 0.0
  %v955 = vmax.f32 %v939, 0.0
  %v956 = vmax.f32 %v940, 0.0
  %v957 = vmax.f32 %v941, 0.0
  %v958 = vmax.f32 %v942, 0.0
  %v959 = vmax.f32 %v943, 0.0
  %v960 = vmax.f32 %v944, 0.0
  %v961 = vld [vmem:[%s9] sm:$0x1]
  %v963 = vlaneseq
  %v964 = vshrl.u32 %v963, 7
  %v965 = vsub.s32 0, %v964
  %v966 = vrot.slane %v961, %v965
  %v968 = vmul.f32 %v945, %v966
  %v969 = vmul.f32 %v946, %v966
  %v970 = vmul.f32 %v947, %v966
  %v971 = vmul.f32 %v948, %v966
  %v972 = vmul.f32 %v949, %v966
  %v973 = vmul.f32 %v950, %v966
  %v974 = vmul.f32 %v951, %v966
  %v975 = vmul.f32 %v952, %v966
  %v976 = vmul.f32 %v953, %v966
  %v977 = vmul.f32 %v954, %v966
  %v978 = vmul.f32 %v955, %v966
  %v979 = vmul.f32 %v956, %v966
  %v980 = vmul.f32 %v957, %v966
  %v981 = vmul.f32 %v958, %v966
  %v982 = vmul.f32 %v959, %v966
  %v983 = vmul.f32 %v960, %v966
  %v984 = vsel %vm80, %v968, 0.0
  %985 = vadd.xlane.f32.xlu0 %v984
  %v986 = vpop.xlane.xlu0 %985
  %v987 = vsel %vm80, %v969, 0.0
  %988 = vadd.xlane.f32.xlu0 %v987
  %v989 = vpop.xlane.xlu0 %988
  %v990 = vsel %vm80, %v970, 0.0
  %991 = vadd.xlane.f32.xlu0 %v990
  %v992 = vpop.xlane.xlu0 %991
  %v993 = vsel %vm80, %v971, 0.0
  %994 = vadd.xlane.f32.xlu0 %v993
  %v995 = vpop.xlane.xlu0 %994
  %v996 = vsel %vm80, %v972, 0.0
  %997 = vadd.xlane.f32.xlu0 %v996
  %v998 = vpop.xlane.xlu0 %997
  %v999 = vsel %vm80, %v973, 0.0
  %1000 = vadd.xlane.f32.xlu0 %v999
  %v1001 = vpop.xlane.xlu0 %1000
  %v1002 = vsel %vm80, %v974, 0.0
  %1003 = vadd.xlane.f32.xlu0 %v1002
  %v1004 = vpop.xlane.xlu0 %1003
  %v1005 = vsel %vm80, %v975, 0.0
  %1006 = vadd.xlane.f32.xlu0 %v1005
  %v1007 = vpop.xlane.xlu0 %1006
  %v1008 = vsel %vm80, %v976, 0.0
  %1009 = vadd.xlane.f32.xlu0 %v1008
  %v1010 = vpop.xlane.xlu0 %1009
  %v1011 = vsel %vm80, %v977, 0.0
  %1012 = vadd.xlane.f32.xlu0 %v1011
  %v1013 = vpop.xlane.xlu0 %1012
  %v1014 = vsel %vm80, %v978, 0.0
  %1015 = vadd.xlane.f32.xlu0 %v1014
  %v1016 = vpop.xlane.xlu0 %1015
  %v1017 = vsel %vm80, %v979, 0.0
  %1018 = vadd.xlane.f32.xlu0 %v1017
  %v1019 = vpop.xlane.xlu0 %1018
  %v1020 = vsel %vm80, %v980, 0.0
  %1021 = vadd.xlane.f32.xlu0 %v1020
  %v1022 = vpop.xlane.xlu0 %1021
  %v1023 = vsel %vm80, %v981, 0.0
  %1024 = vadd.xlane.f32.xlu0 %v1023
  %v1025 = vpop.xlane.xlu0 %1024
  %v1026 = vsel %vm80, %v982, 0.0
  %1027 = vadd.xlane.f32.xlu0 %v1026
  %v1028 = vpop.xlane.xlu0 %1027
  %v1029 = vsel %vm80, %v983, 0.0
  %1030 = vadd.xlane.f32.xlu0 %v1029
  %v1031 = vpop.xlane.xlu0 %1030
  %v1032 = vld [vmem:[#allocation2] sm:$0x1]
  %v1034 = vlaneseq
  %v1035 = vshrl.u32 %v1034, 7
  %v1036 = vsub.s32 0, %v1035
  %v1037 = vrot.slane %v1032, %v1036
  %v1039 = vadd.f32 %v986, %v1037
  %v1040 = vadd.f32 %v989, %v1037
  %v1041 = vadd.f32 %v992, %v1037
  %v1042 = vadd.f32 %v995, %v1037
  %v1043 = vadd.f32 %v998, %v1037
  %v1044 = vadd.f32 %v1001, %v1037
  %v1045 = vadd.f32 %v1004, %v1037
  %v1046 = vadd.f32 %v1007, %v1037
  %v1047 = vadd.f32 %v1010, %v1037
  %v1048 = vadd.f32 %v1013, %v1037
  %v1049 = vadd.f32 %v1016, %v1037
  %v1050 = vadd.f32 %v1019, %v1037
  %v1051 = vadd.f32 %v1022, %v1037
  %v1052 = vadd.f32 %v1025, %v1037
  %v1053 = vadd.f32 %v1028, %v1037
  %v1054 = vadd.f32 %v1031, %v1037
  %v1055 = vxor.u32 %v1039, 2147483648
  %v1056 = vxor.u32 %v1040, 2147483648
  %v1057 = vxor.u32 %v1041, 2147483648
  %v1058 = vxor.u32 %v1042, 2147483648
  %v1059 = vxor.u32 %v1043, 2147483648
  %v1060 = vxor.u32 %v1044, 2147483648
  %v1061 = vxor.u32 %v1045, 2147483648
  %v1062 = vxor.u32 %v1046, 2147483648
  %v1063 = vxor.u32 %v1047, 2147483648
  %v1064 = vxor.u32 %v1048, 2147483648
  %v1065 = vxor.u32 %v1049, 2147483648
  %v1066 = vxor.u32 %v1050, 2147483648
  %v1067 = vxor.u32 %v1051, 2147483648
  %v1068 = vxor.u32 %v1052, 2147483648
  %v1069 = vxor.u32 %v1053, 2147483648
  %v1070 = vxor.u32 %v1054, 2147483648
  %v1071 = vmul.f32 %v1055, 1.442695
  %v1072 = vpow.pop %v1071
  %v1073 = vmul.f32 %v1056, 1.442695
  %v1074 = vpow.pop %v1073
  %v1075 = vmul.f32 %v1057, 1.442695
  %v1076 = vpow.pop %v1075
  %v1077 = vmul.f32 %v1058, 1.442695
  %v1078 = vpow.pop %v1077
  %v1079 = vmul.f32 %v1059, 1.442695
  %v1080 = vpow.pop %v1079
  %v1081 = vmul.f32 %v1060, 1.442695
  %v1082 = vpow.pop %v1081
  %v1083 = vmul.f32 %v1061, 1.442695
  %v1084 = vpow.pop %v1083
  %v1085 = vmul.f32 %v1062, 1.442695
  %v1086 = vpow.pop %v1085
  %v1087 = vmul.f32 %v1063, 1.442695
  %v1088 = vpow.pop %v1087
  %v1089 = vmul.f32 %v1064, 1.442695
  %v1090 = vpow.pop %v1089
  %v1091 = vmul.f32 %v1065, 1.442695
  %v1092 = vpow.pop %v1091
  %v1093 = vmul.f32 %v1066, 1.442695
  %v1094 = vpow.pop %v1093
  %v1095 = vmul.f32 %v1067, 1.442695
  %v1096 = vpow.pop %v1095
  %v1097 = vmul.f32 %v1068, 1.442695
  %v1098 = vpow.pop %v1097
  %v1099 = vmul.f32 %v1069, 1.442695
  %v1100 = vpow.pop %v1099
  %v1101 = vmul.f32 %v1070, 1.442695
  %v1102 = vpow.pop %v1101
  %v1103 = vadd.f32 %v1072, 1.0
  %v1104 = vadd.f32 %v1074, 1.0
  %v1105 = vadd.f32 %v1076, 1.0
  %v1106 = vadd.f32 %v1078, 1.0
  %v1107 = vadd.f32 %v1080, 1.0
  %v1108 = vadd.f32 %v1082, 1.0
  %v1109 = vadd.f32 %v1084, 1.0
  %v1110 = vadd.f32 %v1086, 1.0
  %v1111 = vadd.f32 %v1088, 1.0
  %v1112 = vadd.f32 %v1090, 1.0
  %v1113 = vadd.f32 %v1092, 1.0
  %v1114 = vadd.f32 %v1094, 1.0
  %v1115 = vadd.f32 %v1096, 1.0
  %v1116 = vadd.f32 %v1098, 1.0
  %v1117 = vadd.f32 %v1100, 1.0
  %v1118 = vadd.f32 %v1102, 1.0
  %v1119 = vrcp.pop %v1103
  %v1120 = vmul.f32 1.0, %v1119
  %v1121 = vrcp.pop %v1104
  %v1122 = vmul.f32 1.0, %v1121
  %v1123 = vrcp.pop %v1105
  %v1124 = vmul.f32 1.0, %v1123
  %v1125 = vrcp.pop %v1106
  %v1126 = vmul.f32 1.0, %v1125
  %v1127 = vrcp.pop %v1107
  %v1128 = vmul.f32 1.0, %v1127
  %v1129 = vrcp.pop %v1108
  %v1130 = vmul.f32 1.0, %v1129
  %v1131 = vrcp.pop %v1109
  %v1132 = vmul.f32 1.0, %v1131
  %v1133 = vrcp.pop %v1110
  %v1134 = vmul.f32 1.0, %v1133
  %v1135 = vrcp.pop %v1111
  %v1136 = vmul.f32 1.0, %v1135
  %v1137 = vrcp.pop %v1112
  %v1138 = vmul.f32 1.0, %v1137
  %v1139 = vrcp.pop %v1113
  %v1140 = vmul.f32 1.0, %v1139
  %v1141 = vrcp.pop %v1114
  %v1142 = vmul.f32 1.0, %v1141
  %v1143 = vrcp.pop %v1115
  %v1144 = vmul.f32 1.0, %v1143
  %v1145 = vrcp.pop %v1116
  %v1146 = vmul.f32 1.0, %v1145
  %v1147 = vrcp.pop %v1117
  %v1148 = vmul.f32 1.0, %v1147
  %v1149 = vrcp.pop %v1118
  %v1150 = vmul.f32 1.0, %v1149
  %vm1151 = vcmask 7168
  %1152 = vst.msk [vmem:[%s11] sm:$0xff] %vm1151, %v1120
  %1153 = vst.msk [vmem:[%s11 + $0x8] sm:$0xff] %vm1151, %v1122
  %1154 = vst.msk [vmem:[%s11 + $0x10] sm:$0xff] %vm1151, %v1124
  %1155 = vst.msk [vmem:[%s11 + $0x18] sm:$0xff] %vm1151, %v1126
  %1156 = vst.msk [vmem:[%s11 + $0x20] sm:$0xff] %vm1151, %v1128
  %1157 = vst.msk [vmem:[%s11 + $0x28] sm:$0xff] %vm1151, %v1130
  %1158 = vst.msk [vmem:[%s11 + $0x30] sm:$0xff] %vm1151, %v1132
  %1159 = vst.msk [vmem:[%s11 + $0x38] sm:$0xff] %vm1151, %v1134
  %1160 = vst.msk [vmem:[%s11 + $0x40] sm:$0xff] %vm1151, %v1136
  %1161 = vst.msk [vmem:[%s11 + $0x48] sm:$0xff] %vm1151, %v1138
  %1162 = vst.msk [vmem:[%s11 + $0x50] sm:$0xff] %vm1151, %v1140
  %1163 = vst.msk [vmem:[%s11 + $0x58] sm:$0xff] %vm1151, %v1142
  %1164 = vst.msk [vmem:[%s11 + $0x60] sm:$0xff] %vm1151, %v1144
  %1165 = vst.msk [vmem:[%s11 + $0x68] sm:$0xff] %vm1151, %v1146
  %1166 = vst.msk [vmem:[%s11 + $0x70] sm:$0xff] %vm1151, %v1148
  %1167 = vst.msk [vmem:[%s11 + $0x78] sm:$0xff] %vm1151, %v1150
  // Predicated region
  $region46: #{tpu_custom_call.1} parent=0 // pred_check
    _
  $region47: #{tpu_custom_call.1} parent=0 // pred_check_branch
    %1169 = sbr.rel (0) target = $region49
  $region48: #{tpu_custom_call.1} parent=0 // pred_region
    _
  $region49: #{tpu_custom_call.1} parent=0 // pred_fallthru
    _
  // Predicated region
  $region50: #{tpu_custom_call.1} parent=0 // pred_check
    _
  $region51: #{tpu_custom_call.1} parent=0 // pred_check_branch
    %1171 = sbr.rel (0) target = $region53
  $region52: #{tpu_custom_call.1} parent=0 // pred_region
    _
  $region53: #{tpu_custom_call.1} parent=0 // pred_fallthru
    _

</llo_original>
